<compile_context>
chip_gen: v7x
topology: tpu7x:2x2x1
jax: 0.10.0
libtpu: 0.0.40
codegen_flags: <defaults>
</compile_context>

<pallas_src>
import jax
import jax.numpy as jnp
from jax.experimental import pallas as pl
from jax.experimental.pallas import tpu as pltpu


def _round_up(x, m):
    return ((x + m - 1) // m) * m


def _vmem_capacity_bytes():
    # Per-TensorCore VMEM capacity; conservative fallback if the query is
    # unavailable (64 MiB == v7x per-TC size, the smallest in the fleet).
    try:
        return int(pltpu.get_tpu_info().vmem_capacity_bytes)
    except Exception:
        return 64 << 20


def _linear_kernel(x_ref, w_ref, b_ref, o_ref, acc_ref):
    # x_ref: (TM, TK)  w_ref: (TK, N)  b_ref: (1, N)  o_ref: (TM, N)
    # acc_ref: (TM, N) f32 scratch, persistent across the K ("arbitrary") axis.
    k = pl.program_id(1)

    @pl.when(k == 0)
    def _():
        acc_ref[...] = jnp.zeros_like(acc_ref)

    # Canonical (M,K)x(K,N) MXU contraction, f32 accumulate.
    acc_ref[...] += jnp.dot(
        x_ref[...], w_ref[...], preferred_element_type=jnp.float32
    )

    @pl.when(k == pl.num_programs(1) - 1)
    def _():
        o_ref[...] = (acc_ref[...] + b_ref[...]).astype(o_ref.dtype)


def logistic_regression_multi(x, weight, bias, input_size):
    """Forward of LogisticRegressionMulti: x.view(-1, input_size) @ W.T + b.

    x:      any shape with total elements divisible by input_size
    weight: (output_size, input_size)  -- PyTorch nn.Linear convention
    bias:   (output_size,)
    """
    x2d = x.reshape(-1, input_size)                  # x.view(-1, input_size)
    M, K = x2d.shape
    N = weight.shape[0]
    itemsize = jnp.dtype(x2d.dtype).itemsize

    # One-time host transpose -> canonical (K, N) RHS layout for the MXU.
    w_t = weight.T                                   # (K, N)
    b2d = bias.reshape(1, N)

    # ---- per-chip VMEM budgeting -------------------------------------------
    vmem_cap = _vmem_capacity_bytes()                # 64 MiB/TC v7x; 128 MiB v5e/v6e
    vmem_limit = int(max(vmem_cap - (8 << 20), 16 << 20))   # compiler headroom
    budget = int(max(vmem_cap - (16 << 20), 12 << 20))      # what we tile against

    # K tiling: keep the whole (K, N) weight resident if its *double-buffered*
    # footprint is comfortably small; otherwise stream TK-wide slabs (TK a
    # multiple of 128) over a K reduction grid axis.
    if 2 * K * N * itemsize <= budget // 3:
        TK = K
        Kp = K
    else:
        TK = 512
        while TK > 128 and 2 * TK * N * itemsize > budget // 3:
            TK //= 2
        Kp = _round_up(K, TK)
    # TODO(synk): very large output_size would additionally want an N grid axis.

    # Row tile: fill the remaining budget (counting 2x for every pipelined
    # input/output block + the f32 accumulator), keep ~8 grid steps alive for
    # the DMA pipeline when M is large, cap at 4096 rows.
    fixed = 2 * (TK * N + N) * itemsize              # W + bias, double-buffered
    per_row = 2 * (TK + N) * itemsize + N * 4        # x + out (2x) + acc scratch
    tm_budget = max(8, ((budget - fixed) // max(per_row, 1)) // 8 * 8)
    tm_steps = max(8, _round_up(pl.cdiv(M, 8), 8))   # >= ~8 M-steps when M is big
    TM = max(8, min(tm_budget, tm_steps, 4096, _round_up(max(M, 1), 8)))
    Mp = _round_up(max(M, 1), TM)

    # Pad only when required (rows to a TM multiple / K to a TK multiple);
    # zero K-padding contributes 0 to the contraction.
    if Mp != M or Kp != K:
        x_in = jnp.zeros((Mp, Kp), x2d.dtype).at[:M, :K].set(x2d)
    else:
        x_in = x2d
    w_in = jnp.zeros((Kp, N), w_t.dtype).at[:K, :].set(w_t) if Kp != K else w_t

    grid = (Mp // TM, Kp // TK)

    cost = pl.CostEstimate(
        flops=2 * Mp * Kp * N,
        transcendentals=0,
        bytes_accessed=itemsize * (Mp * Kp + Kp * N + N + Mp * N),
    )

    out = pl.pallas_call(
        _linear_kernel,
        out_shape=jax.ShapeDtypeStruct((Mp, N), x2d.dtype),
        grid_spec=pltpu.PrefetchScalarGridSpec(
            num_scalar_prefetch=0,
            grid=grid,
            in_specs=[
                pl.BlockSpec((TM, TK), lambda i, k: (i, k)),  # x: streamed over M,K
                pl.BlockSpec((TK, N), lambda i, k: (k, 0)),   # W^T slab (resident if 1 K-step)
                pl.BlockSpec((1, N), lambda i, k: (0, 0)),    # bias: resident
            ],
            out_specs=pl.BlockSpec((TM, N), lambda i, k: (i, 0)),
            scratch_shapes=[pltpu.VMEM((TM, N), jnp.float32)],
        ),
        compiler_params=pltpu.CompilerParams(
            dimension_semantics=("parallel", "arbitrary"),
            vmem_limit_bytes=vmem_limit,
        ),
        cost_estimate=cost,
    )(x_in, w_in, b2d)

    # Strip row padding only (N is already exact).
    return out[:M, :] if Mp != M else out


if __name__ == "__main__":
    # config: input_size=32, output_size=8; x has 8 rows worth of data.
    input_size = 32
    output_size = 8
    batch = 8

    key = jax.random.PRNGKey(0)
    kx, kw, kb = jax.random.split(key, 3)

    x = jax.random.normal(kx, (batch, input_size), dtype=jnp.float32)
    # Deterministic Linear params (synthetic, not a checkpoint load).
    weight = jax.random.normal(kw, (output_size, input_size), dtype=jnp.float32) * 0.1
    bias = jax.random.normal(kb, (output_size,), dtype=jnp.float32) * 0.1

    out = logistic_regression_multi(x, weight, bias, input_size)
    out = jax.block_until_ready(out)

    # Reference check against plain JAX (same math as PyTorch nn.Linear).
    ref = x.reshape(-1, input_size) @ weight.T + bias
    assert out.shape == (batch, output_size)
    assert jnp.allclose(out, ref, atol=1e-5, rtol=1e-5)

    print("KERNEL_OK")
</pallas_src>

<mosaic_0001>
module attributes {stable_mosaic.version = 11 : i64} {
  func.func @_linear_kernel(%arg0: i32, %arg1: i32, %arg2: memref<8x32xf32, #tpu.memory_space<vmem>>, %arg3: memref<32x8xf32, #tpu.memory_space<vmem>>, %arg4: memref<1x8xf32, #tpu.memory_space<vmem>>, %arg5: memref<8x8xf32, #tpu.memory_space<vmem>>, %arg6: memref<8x8xf32, #tpu.memory_space<vmem>>) attributes {dimension_semantics = [#tpu.dimension_semantics<parallel>, #tpu.dimension_semantics<arbitrary>], iteration_bounds = array<i64: 1, 1>, scalar_prefetch = 0 : i64, scratch_operands = 1 : i64, tpu.core_type = #tpu.core_type<tc>, window_params = [{transform_indices = @transform_0, window_bounds = array<i64: 8, 32>}, {transform_indices = @transform_1, window_bounds = array<i64: 32, 8>}, {pipeline_mode = #tpu.pipeline_mode<synchronous>, transform_indices = @transform_2, window_bounds = array<i64: 1, 8>}, {transform_indices = @transform_3, window_bounds = array<i64: 8, 8>}]} {
    %c0_i32 = arith.constant 0 : i32
    %0 = arith.cmpi eq, %arg1, %c0_i32 : i32
    %1 = arith.extui %0 : i1 to i32
    %c0_i32_0 = arith.constant 0 : i32
    %2 = arith.cmpi ne, %1, %c0_i32_0 : i32
    scf.if %2 {
      %cst_10 = arith.constant 0.000000e+00 : f32
      %12 = vector.broadcast %cst_10 : f32 to vector<8x8xf32>
      %c0_11 = arith.constant 0 : index
      %c0_12 = arith.constant 0 : index
      %13 = vector.load %arg6[%c0_11, %c0_12] : memref<8x8xf32, #tpu.memory_space<vmem>>, vector<8x8xf32>
      tpu.vector_store %arg6[%c0_11, %c0_12], %12 {strides = array<i32>} : memref<8x8xf32, #tpu.memory_space<vmem>>, vector<8x8xf32>,
    } else {
    }
    %c0 = arith.constant 0 : index
    %c0_1 = arith.constant 0 : index
    %3 = vector.load %arg6[%c0, %c0_1] : memref<8x8xf32, #tpu.memory_space<vmem>>, vector<8x8xf32>
    %c0_2 = arith.constant 0 : index
    %c0_3 = arith.constant 0 : index
    %4 = vector.load %arg2[%c0_2, %c0_3] : memref<8x32xf32, #tpu.memory_space<vmem>>, vector<8x32xf32>
    %c0_4 = arith.constant 0 : index
    %c0_5 = arith.constant 0 : index
    %5 = vector.load %arg3[%c0_4, %c0_5] : memref<32x8xf32, #tpu.memory_space<vmem>>, vector<32x8xf32>
    %cst = arith.constant dense<0.000000e+00> : vector<8x8xf32>
    %6 = tpu.matmul %4, %5, %cst {dimension_numbers = #tpu.dot_dimension_numbers<[1], [0], [0], [1], [0, 0, 1, 1], [], []>} : vector<8x32xf32>, vector<32x8xf32>, vector<8x8xf32> -> vector<8x8xf32>
    %7 = arith.addf %3, %6 : vector<8x8xf32>
    %c0_6 = arith.constant 0 : index
    %c0_7 = arith.constant 0 : index
    %8 = vector.load %arg6[%c0_6, %c0_7] : memref<8x8xf32, #tpu.memory_space<vmem>>, vector<8x8xf32>
    tpu.vector_store %arg6[%c0_6, %c0_7], %7 {strides = array<i32>} : memref<8x8xf32, #tpu.memory_space<vmem>>, vector<8x8xf32>,
    %c0_i32_8 = arith.constant 0 : i32
    %9 = arith.cmpi eq, %arg1, %c0_i32_8 : i32
    %10 = arith.extui %9 : i1 to i32
    %c0_i32_9 = arith.constant 0 : i32
    %11 = arith.cmpi ne, %10, %c0_i32_9 : i32
    scf.if %11 {
      %c0_10 = arith.constant 0 : index
      %c0_11 = arith.constant 0 : index
      %12 = vector.load %arg6[%c0_10, %c0_11] : memref<8x8xf32, #tpu.memory_space<vmem>>, vector<8x8xf32>
      %c0_12 = arith.constant 0 : index
      %c0_13 = arith.constant 0 : index
      %13 = vector.load %arg4[%c0_12, %c0_13] : memref<1x8xf32, #tpu.memory_space<vmem>>, vector<1x8xf32>
      %14 = vector.broadcast %13 : vector<1x8xf32> to vector<8x8xf32>
      %15 = arith.addf %12, %14 : vector<8x8xf32>
      %c0_14 = arith.constant 0 : index
      %c0_15 = arith.constant 0 : index
      %16 = vector.load %arg5[%c0_14, %c0_15] : memref<8x8xf32, #tpu.memory_space<vmem>>, vector<8x8xf32>
      tpu.vector_store %arg5[%c0_14, %c0_15], %15 {strides = array<i32>} : memref<8x8xf32, #tpu.memory_space<vmem>>, vector<8x8xf32>,
    } else {
    }
    return
  }
  func.func @transform_0(%arg0: i32, %arg1: i32) -> (i32, i32) {
    %c0_i32 = arith.constant 0 : i32
    return %arg0, %arg1 : i32, i32
  }
  func.func @transform_1(%arg0: i32, %arg1: i32) -> (i32, i32) {
    %c0_i32 = arith.constant 0 : i32
    %c0_i32_0 = arith.constant 0 : i32
    return %arg1, %c0_i32 : i32, i32
  }
  func.func @transform_2(%arg0: i32, %arg1: i32) -> (i32, i32) {
    %c0_i32 = arith.constant 0 : i32
    %c0_i32_0 = arith.constant 0 : i32
    %c0_i32_1 = arith.constant 0 : i32
    return %c0_i32, %c0_i32_0 : i32, i32
  }
  func.func @transform_3(%arg0: i32, %arg1: i32) -> (i32, i32) {
    %c0_i32 = arith.constant 0 : i32
    %c0_i32_0 = arith.constant 0 : i32
    return %arg0, %c0_i32 : i32, i32
  }
}

</mosaic_0001>

<llo_original>
// kernel: tpu_custom_call.1
$region0: #{tpu_custom_call.1}
  #allocation0 [shape = 'u32[]', space=smem, size = 0x4, offset = 0x4, fixed_abs, tag = 'smem constant byte address 0x4 - core index']
  #allocation1 [shape = 'u32[144,128]{1,0:T(1,128)}', space=vmem, size = 0x12000, scoped, tag = 'internal scratch']
  #allocation2 [shape = 'f32[8,8]{1,0:T(8,128)}', space=vmem, size = 0x1000, scoped, tag = 'scratch operand']
  %s0 = inlined_call_operand.vmem [shape: f32[8,32], index: 0, kind: input, shape index: {}]
  %s1 = inlined_call_operand.vmem [shape: f32[32,8], index: 1, kind: input, shape index: {}]
  %s2 = inlined_call_operand.vmem [shape: f32[1,8], index: 2, kind: input, shape index: {}]
  %s3 = inlined_call_operand.hbm [shape: f32[8,8], index: 3, kind: output, shape index: {}]
  %s4 = sld [smem:[#allocation0]]
  $region30: #{tpu_custom_call.1} parent=0
    _
  %s6 = ssub.s32 1, %s4
  %s7 = scalar_select 0, %s6, %s4
  $region1: #{tpu_custom_call.1} parent=0
    #allocation3 [shape = 'u8[4096]{0}', space=vmem, size = 0x1000, scoped, tag = 'output window, operand 0, single buffered']
    #allocation4 [shape = 's32[1]{0}', space=sflag, size = 0x4, scoped, tag = 'scoped memory for tpu_custom_call.1']
    %8 = vsyncpa [#allocation4], 0
    // Predicated region
    $region2: #{tpu_custom_call.1} parent=1 // pred_check
      _
    $region3: #{tpu_custom_call.1} parent=1 // pred_check_branch
      %10 = sbr.rel (0) target = $region5
    $region4: #{tpu_custom_call.1} parent=1 // pred_region
      _
    $region5: #{tpu_custom_call.1} parent=1 // pred_fallthru
      _
    // Predicated region
    $region6: #{tpu_custom_call.1} parent=1 // pred_check
      _
    $region7: #{tpu_custom_call.1} parent=1 // pred_check_branch
      %12 = sbr.rel (0) target = $region9
    $region8: #{tpu_custom_call.1} parent=1 // pred_region
      _
    $region9: #{tpu_custom_call.1} parent=1 // pred_fallthru
      _
    // Predicated region
    $region10: #{tpu_custom_call.1} parent=1 // pred_check
      _
    $region11: #{tpu_custom_call.1} parent=1 // pred_check_branch
      %14 = sbr.rel (0) target = $region13
    $region12: #{tpu_custom_call.1} parent=1 // pred_region
      _
    $region13: #{tpu_custom_call.1} parent=1 // pred_fallthru
      _
    %p15 = scmp.eq.s32.totalorder 0, 0
    // Predicated region
    $region14: #{tpu_custom_call.1} parent=1 // pred_check
      %p16 = pneg %p15
    $region15: #{tpu_custom_call.1} parent=1 // pred_check_branch
      %18 = sbr.rel (%p16) target = $region17
    $region16: #{tpu_custom_call.1} parent=1 // pred_region
      %vm19 = vcmask 64512
      %20 = vst.msk [vmem:[#allocation2] sm:$0xff] %vm19, 0.0
    $region17: #{tpu_custom_call.1} parent=1 // pred_fallthru
      _
    %v21 = vld [vmem:[#allocation2] sm:$0xff]
    %v22 = vld [vmem:[%s0] sm:$0xff]
    %v23 = vld [vmem:[%s1] sm:$0xff]
    %v24 = vld [vmem:[%s1 + $0x8] sm:$0xff]
    %v25 = vld [vmem:[%s1 + $0x10] sm:$0xff]
    %v26 = vld [vmem:[%s1 + $0x18] sm:$0xff]
    %vm27 = vcmask 261120
    %v29 = vsel %vm27, %v22, 0
    %31 = vmatprep.subr.mxu0 0.0
    %32 = vmatpush1.msra.mxu0 %v23
    %33 = vmatprep.subr.mxu0 0.0
    %34 = vmatpush1.msra.mxu0 %v24
    %35 = vmatprep.subr.mxu0 0.0
    %36 = vmatpush1.msra.mxu0 %v25
    %37 = vmatprep.subr.mxu0 0.0
    %38 = vmatpush1.msra.mxu0 %v26
    %39 = vmatprep.subr.mxu0 0.0
    %40 = vmatpush1.msra.mxu0 0.0
    %41 = vmatprep.subr.mxu0 0.0
    %42 = vmatpush1.msra.mxu0 0.0
    %43 = vmatprep.subr.mxu0 0.0
    %44 = vmatpush1.msra.mxu0 0.0
    %45 = vmatprep.subr.mxu0 0.0
    %46 = vmatpush1.msra.mxu0 0.0
    %47 = vmatprep.subr.mxu0 0.0
    %48 = vmatpush1.msra.mxu0 0.0
    %49 = vmatprep.subr.mxu0 0.0
    %50 = vmatpush1.msra.mxu0 0.0
    %51 = vmatprep.subr.mxu0 0.0
    %52 = vmatpush1.msra.mxu0 0.0
    %53 = vmatprep.subr.mxu0 0.0
    %54 = vmatpush1.msra.mxu0 0.0
    %55 = vmatprep.subr.mxu0 0.0
    %56 = vmatpush1.msra.mxu0 0.0
    %57 = vmatprep.subr.mxu0 0.0
    %58 = vmatpush1.msra.mxu0 0.0
    %59 = vmatprep.subr.mxu0 0.0
    %60 = vmatpush1.msra.mxu0 0.0
    %61 = vmatprep.subr.mxu0 0.0
    %62 = vmatpush1.msra.mxu0 0.0
    %63 = vmatprep.subr.mxu0 0.0
    %64 = vmatpush1.msra.mxu0 0.0
    %65 = vmatprep.subr.mxu0 0.0
    %66 = vmatpush1.msra.mxu0 0.0
    %67 = vmatprep.subr.mxu0 0.0
    %68 = vmatpush1.msra.mxu0 0.0
    %69 = vmatprep.subr.mxu0 0.0
    %70 = vmatpush1.msra.mxu0 0.0
    %71 = vmatprep.subr.mxu0 0.0
    %72 = vmatpush1.msra.mxu0 0.0
    %73 = vmatprep.subr.mxu0 0.0
    %74 = vmatpush1.msra.mxu0 0.0
    %75 = vmatprep.subr.mxu0 0.0
    %76 = vmatpush1.msra.mxu0 0.0
    %77 = vmatprep.subr.mxu0 0.0
    %78 = vmatpush1.msra.mxu0 0.0
    %79 = vmatprep.subr.mxu0 0.0
    %80 = vmatpush1.msra.mxu0 0.0
    %81 = vmatprep.subr.mxu0 0.0
    %82 = vmatpush1.msra.mxu0 0.0
    %83 = vmatprep.subr.mxu0 0.0
    %84 = vmatpush1.msra.mxu0 0.0
    %85 = vmatprep.subr.mxu0 0.0
    %86 = vmatpush1.msra.mxu0 0.0
    %87 = vmatprep.subr.mxu0 0.0
    %88 = vmatpush1.msra.mxu0 0.0
    %89 = vmatprep.subr.mxu0 0.0
    %90 = vmatpush1.msra.mxu0 0.0
    %91 = vmatprep.subr.mxu0 0.0
    %92 = vmatpush1.msra.mxu0 0.0
    %93 = vmatprep.subr.mxu0 0.0
    %94 = vmatpush1.msra.mxu0 0.0
    %95 = vmatprep.mubr.f32.mxu0 0.0
    %96 = vmatmul.mubr.f32.gmra.mrb[0].mxu0 %v29
    %v97 = vpop.f32.mrb[0].mxu0
    %v98 = vadd.f32 0.0, %v97
    %v99 = vpop.f32.mrb[0].mxu0
    %100 = vdwg.mxu0
    %v101 = vadd.f32 %v21, %v98
    %vm102 = vcmask 64512
    %103 = vst.msk [vmem:[#allocation2] sm:$0xff] %vm102, %v101
    // Predicated region
    $region18: #{tpu_custom_call.1} parent=1 // pred_check
      %p104 = pneg %p15
    $region19: #{tpu_custom_call.1} parent=1 // pred_check_branch
      %106 = sbr.rel (%p104) target = $region21
    $region20: #{tpu_custom_call.1} parent=1 // pred_region
      %v107 = vld [vmem:[#allocation2] sm:$0xff]
      %v108 = vld [vmem:[%s2] sm:$0x1]
      %v110 = vlaneseq
      %v111 = vshrl.u32 %v110, 7
      %v112 = vsub.s32 0, %v111
      %v113 = vrot.slane %v108, %v112
      %v115 = vadd.f32 %v107, %v113
      %116 = vst.msk [vmem:[#allocation3] sm:$0xff] %vm102, %v115
    $region21: #{tpu_custom_call.1} parent=1 // pred_fallthru
      _
    // Predicated region
    $region22: #{tpu_custom_call.1} parent=1 // pred_check
      _
    $region23: #{tpu_custom_call.1} parent=1 // pred_check_branch
      %118 = sbr.rel (0) target = $region25
    $region24: #{tpu_custom_call.1} parent=1 // pred_region
      %s120 = ssub.s32 128, 128
      %121 = vsyncadd [#allocation4], %s120
      %s123 = sshll.u32 [#allocation3], 4
      %s124 = int_to_ptr.vmem [resolvable:$true] %s123
      %126 = dma.vmem_to_hbm [thread:$0]  %s124, 128, %s3, [#allocation4]
    $region25: #{tpu_custom_call.1} parent=1 // pred_fallthru
      _
    // Predicated region
    $region26: #{tpu_custom_call.1} parent=1 // pred_check
      _
    $region27: #{tpu_custom_call.1} parent=1 // pred_check_branch
      %128 = sbr.rel (0) target = $region29
    $region28: #{tpu_custom_call.1} parent=1 // pred_region
      %129 = dma.done [#allocation4], 128
    $region29: #{tpu_custom_call.1} parent=1 // pred_fallthru
      _
    %130 = vsyncpa [#allocation4], 1

</llo_original>
